<compile_context>
chip_gen: v5e
topology: v5e:2x2
jax: 0.10.0
libtpu: 0.0.40
codegen_flags: <defaults>
</compile_context>

<pallas_src>
import jax
import jax.numpy as jnp
from jax import lax
from jax.experimental import pallas as pl
from jax.experimental.pallas import tpu as pltpu

# ---- model / problem sizes (small, consistent with the module) --------------
VOCAB = 50          # vocab_size
LABEL = 5           # label_size
E = 32              # input_size (embedding dim)
C = E // 2          # conv out channels (16) == LSTM input size
H = 32              # lstm hidden_size
B = 2               # batch
L = 16              # token sequence length
SEQ = 6             # 6 CNN branches -> LSTM sequence length
CONV_CFG = [(4, 2), (4, 2), (3, 1), (3, 1), (2, 1), (2, 1)]  # (kernel, padding)
MAXPAD = 2
MAXK = 4

OUTP = 32           # conv output positions per batch (padded, sublane-aligned)
EB = 40             # per-batch rows in the padded one-hot frame (>= OUTP+MAXK-1)
VPAD = 64           # vocab padded to 64 lanes
NCP = 128           # conv-output channel lanes (6*C = 96, zero-padded to 128)
G4 = 4 * H          # fused LSTM gate width (128)

# ---- single packed-parameter buffer layout (row offsets all multiples of 8) -
R_EW = 0                         # (MAXK*VPAD, 128) = (256,128): emb @ W_tap_j
R_BCONV = R_EW + MAXK * VPAD     # 256: 1 row, stacked conv biases
R_WIH = R_BCONV + 8              # 264: (C, 4H) = (16,128)  W_ih^T
R_BG = R_WIH + C                 # 280: 1 row, b_ih + b_hh
R_WHH = R_BG + 8                 # 288: (H, 4H) = (32,128)  W_hh^T
R_WLIN = R_WHH + H               # 320: (H, 128) linear W^T (LABEL cols used)
R_BLIN = R_WLIN + H              # 352: 1 row, linear bias
PK_ROWS = R_BLIN + 8             # 360


# ---------------------------------------------------------------------------
# Pallas kernel: one fused launch = embedding + 6 convs + pool + LSTM + linear
# ---------------------------------------------------------------------------
def _net_kernel(ids_ref, pk_ref, out_ref):
    f32 = jnp.float32
    ids = ids_ref[...]                                         # (B*L, 1) int32

    # ---- token one-hots over the padded vocab lanes ----------------------
    vlane = lax.broadcasted_iota(jnp.int32, (B * L, VPAD), 1)
    oh = (jnp.broadcast_to(ids, (B * L, VPAD)) == vlane).astype(f32)

    # ---- per-batch zero-padded frame (conv 'same' padding, done on ids) --
    zl = jnp.zeros((MAXPAD, VPAD), f32)
    zr = jnp.zeros((EB - MAXPAD - L, VPAD), f32)
    pieces = []
    for b in range(B):
        pieces += [zl, oh[b * L:(b + 1) * L, :], zr]
    ohpad = jnp.concatenate(pieces, axis=0)                    # (B*EB, 64)

    # ---- all 6 conv branches: 4 tap matmuls against (emb @ W_tap_j) ------
    # y[b*OUTP+p, br*C+c] = sum_j emb[x[b, p+j-2]] . W_br[c, :, j-(2-pad_br)]
    acc = None
    for j in range(MAXK):
        oh_j = jnp.concatenate(
            [ohpad[b * EB + j:b * EB + j + OUTP, :] for b in range(B)],
            axis=0)                                            # (B*OUTP, 64)
        ew_j = pk_ref[R_EW + j * VPAD:R_EW + (j + 1) * VPAD, :]   # (64, 128)
        d = jnp.dot(oh_j, ew_j, preferred_element_type=f32)
        acc = d if acc is None else acc + d
    bconv = pk_ref[R_BCONV:R_BCONV + 1, :]                     # (1, 128)
    y = jnp.maximum(acc + bconv, 0.0)                          # (B*OUTP, 128)

    # ---- masked global max-pool (valid lengths 17/17/16/16/17/17) --------
    pos = lax.broadcasted_iota(jnp.int32, (OUTP, NCP), 0)
    lane = lax.broadcasted_iota(jnp.int32, (OUTP, NCP), 1)
    k3 = (lane >= 2 * C) & (lane < 4 * C)                      # kernel=3 branches
    valid = pos < jnp.where(k3, L, L + 1)
    neg = jnp.float32(-1e30)                                   # robust sentinel
    rows = [jnp.max(jnp.where(valid, y[b * OUTP:(b + 1) * OUTP, :], neg),
                    axis=0, keepdims=True) for b in range(B)]
    rows.append(jnp.zeros((8 - B, NCP), f32))
    feats8 = jnp.concatenate(rows, axis=0)                     # (8, 128)

    # ---- LSTM over the 6 branch features (serial h->h chain) -------------
    wih = pk_ref[R_WIH:R_WIH + C, :]                           # (16, 128)
    bg = pk_ref[R_BG:R_BG + 1, :]                              # (1, 128)
    whh = pk_ref[R_WHH:R_WHH + H, :]                           # (32, 128)

    lane8 = lax.broadcasted_iota(jnp.int32, (8, G4), 1)
    is_g = (lane8 >= 2 * H) & (lane8 < 3 * H)                  # tanh (g) lanes
    gscale = jnp.where(is_g, 1.0, 0.5).astype(f32)             # sigmoid-via-tanh

    h = jnp.zeros((8, H), f32)
    c = jnp.zeros((8, H), f32)
    for t in range(SEQ):
        zin = jnp.dot(feats8[:, t * C:(t + 1) * C], wih,
                      preferred_element_type=f32)              # off the h-chain
        z = zin + bg + jnp.dot(h, whh, preferred_element_type=f32)
        ta = jnp.tanh(z * gscale)                              # 1 EUP pass / step
        act = jnp.where(is_g, ta, 0.5 * ta + 0.5)              # sigmoid(x)=0.5*tanh(x/2)+0.5
        i_g = act[:, 0:H]
        f_g = act[:, H:2 * H]
        g_g = act[:, 2 * H:3 * H]
        o_g = act[:, 3 * H:4 * H]
        c = f_g * c + i_g * g_g
        h = o_g * jnp.tanh(c)

    # ---- final linear, one lane-dense (8, 128) store ----------------------
    wlin = pk_ref[R_WLIN:R_WLIN + H, :]                        # (32, 128)
    blin = pk_ref[R_BLIN:R_BLIN + 1, :]                        # (1, 128)
    out_ref[...] = jnp.dot(h, wlin, preferred_element_type=f32) + blin


# ---------------------------------------------------------------------------
# Parameter init (deterministic, PyTorch-layout shapes from __init__)
# ---------------------------------------------------------------------------
def init_params(key):
    keys = jax.random.split(key, 20)

    def nrm(k, shape):
        return jax.random.normal(k, shape, jnp.float32) * 0.1

    emb = nrm(keys[0], (VOCAB, E)).at[0].set(0.0)      # padding_idx=0 -> zeros
    convs = []
    for i, (k, _pad) in enumerate(CONV_CFG):
        w = nrm(keys[1 + 2 * i], (C, E, k))            # Conv1d weight (out, in, k)
        b = nrm(keys[2 + 2 * i], (C,))
        convs.append((w, b))
    wih = nrm(keys[13], (4 * H, C))                    # LSTM weight_ih_l0
    whh = nrm(keys[14], (4 * H, H))                    # LSTM weight_hh_l0
    bih = nrm(keys[15], (4 * H,))
    bhh = nrm(keys[16], (4 * H,))
    wlin = nrm(keys[17], (LABEL, H))                   # Linear weight
    blin = nrm(keys[18], (LABEL,))
    return dict(emb=emb, convs=convs, wih=wih, whh=whh, bih=bih, bhh=bhh,
                wlin=wlin, blin=blin)


# ---------------------------------------------------------------------------
# One-time parameter packing (host side, OUTSIDE the jitted forward)
# ---------------------------------------------------------------------------
def pack_params(params):
    f32 = jnp.float32
    hp = lax.Precision.HIGHEST

    # tap-aligned conv weights (MAXK, E, NCP)
    wtap = jnp.zeros((MAXK, E, NCP), f32)
    bconv = jnp.zeros((NCP,), f32)
    for br, ((w, b), (k, pad)) in enumerate(zip(params['convs'], CONV_CFG)):
        start = MAXPAD - pad                       # tap alignment in 4-tap window
        wt = jnp.transpose(w, (2, 1, 0))           # (k, E, C)
        wtap = wtap.at[start:start + k, :, br * C:(br + 1) * C].set(wt)
        bconv = bconv.at[br * C:(br + 1) * C].set(b)

    # fold the embedding table into the conv taps: EW_j = emb_pad @ W_tap_j
    embp = jnp.zeros((VPAD, E), f32).at[:VOCAB, :].set(params['emb'])
    ew = jnp.einsum('ve,jec->jvc', embp, wtap, precision=hp)   # (4, 64, 128)

    pk = jnp.zeros((PK_ROWS, NCP), f32)
    pk = pk.at[R_EW:R_EW + MAXK * VPAD, :].set(ew.reshape(MAXK * VPAD, NCP))
    pk = pk.at[R_BCONV, :].set(bconv)
    pk = pk.at[R_WIH:R_WIH + C, :].set(params['wih'].T)        # (16, 128)
    pk = pk.at[R_BG, :].set(params['bih'] + params['bhh'])
    pk = pk.at[R_WHH:R_WHH + H, :].set(params['whh'].T)        # (32, 128)
    pk = pk.at[R_WLIN:R_WLIN + H, 0:LABEL].set(params['wlin'].T)
    pk = pk.at[R_BLIN, 0:LABEL].set(params['blin'])
    return pk


# ---------------------------------------------------------------------------
# Forward: one fused Pallas launch (ids reshape is a free metadata op)
# ---------------------------------------------------------------------------
@jax.jit
def net_forward(pk, x):
    ids2d = x.reshape(-1, 1).astype(jnp.int32)                 # (B*L, 1)
    vmem = pltpu.MemorySpace.VMEM
    out = pl.pallas_call(
        _net_kernel,
        out_shape=jax.ShapeDtypeStruct((8, G4), jnp.float32),
        in_specs=[pl.BlockSpec(memory_space=vmem),
                  pl.BlockSpec(memory_space=vmem)],
        out_specs=pl.BlockSpec(memory_space=vmem),
    )(ids2d, pk)
    return out[:x.shape[0], :LABEL]


# ---------------------------------------------------------------------------
# Pure-JAX reference (mirrors torch semantics, f32-accurate matmuls)
# ---------------------------------------------------------------------------
def reference(params, x):
    hp = lax.Precision.HIGHEST
    emb = jnp.take(params['emb'], x, axis=0)          # (B, L, E)
    xc = jnp.transpose(emb, (0, 2, 1))                # (B, E, L)  (NCL)
    feats = []
    for (w, b), (_k, pad) in zip(params['convs'], CONV_CFG):
        y = lax.conv_general_dilated(
            xc, w, window_strides=(1,), padding=[(pad, pad)],
            dimension_numbers=('NCH', 'OIH', 'NCH'), precision=hp)
        y = jnp.maximum(y + b[None, :, None], 0.0)
        feats.append(jnp.max(y, axis=-1))             # (B, C)
    seq = jnp.stack(feats, axis=1)                    # (B, 6, C)

    wih, whh = params['wih'], params['whh']
    bsum = params['bih'] + params['bhh']
    h = jnp.zeros((x.shape[0], H), jnp.float32)
    c = jnp.zeros_like(h)
    for t in range(seq.shape[1]):
        g = (jnp.dot(seq[:, t], wih.T, precision=hp)
             + jnp.dot(h, whh.T, precision=hp) + bsum)
        i_g = jax.nn.sigmoid(g[:, :H])
        f_g = jax.nn.sigmoid(g[:, H:2 * H])
        g_g = jnp.tanh(g[:, 2 * H:3 * H])
        o_g = jax.nn.sigmoid(g[:, 3 * H:])
        c = f_g * c + i_g * g_g
        h = o_g * jnp.tanh(c)
    return jnp.dot(h, params['wlin'].T, precision=hp) + params['blin']


if __name__ == "__main__":
    key = jax.random.PRNGKey(0)
    kp, kx = jax.random.split(key)
    params = init_params(kp)
    x = jax.random.randint(kx, (B, L), 0, VOCAB, dtype=jnp.int32)

    pk = jax.block_until_ready(pack_params(params))   # one-time packing

    out = jax.block_until_ready(net_forward(pk, x))
    assert out.shape == (B, LABEL), out.shape

    ref = reference(params, x)
    assert jnp.allclose(out, ref, atol=2e-3, rtol=2e-3), (out, ref)

    print("KERNEL_OK")
</pallas_src>

<mosaic_0001>
module attributes {stable_mosaic.version = 11 : i64} {
  func.func @_net_kernel(%arg0: memref<32x1xi32, #tpu.memory_space<vmem>>, %arg1: memref<360x128xf32, #tpu.memory_space<vmem>>, %arg2: memref<8x128xf32, #tpu.memory_space<vmem>>) attributes {dimension_semantics = [], scalar_prefetch = 0 : i64, scratch_operands = 0 : i64, tpu.core_type = #tpu.core_type<tc>} {
    %c0 = arith.constant 0 : index
    %c0_0 = arith.constant 0 : index
    %0 = vector.load %arg0[%c0, %c0_0] : memref<32x1xi32, #tpu.memory_space<vmem>>, vector<32x1xi32>
    %1 = tpu.iota {dimensions = array<i32: 1>} : vector<32x64xi32>
    %2 = vector.shape_cast %0 : vector<32x1xi32> to vector<32x1xi32>
    %3 = vector.broadcast %2 : vector<32x1xi32> to vector<32x64xi32>
    %4 = arith.cmpi eq, %3, %1 : vector<32x64xi32>
    %5 = arith.extui %4 : vector<32x64xi1> to vector<32x64xi32>
    %6 = arith.sitofp %5 : vector<32x64xi32> to vector<32x64xf32>
    %cst = arith.constant 0.000000e+00 : f32
    %7 = vector.broadcast %cst : f32 to vector<2x64xf32>
    %cst_1 = arith.constant 0.000000e+00 : f32
    %8 = vector.broadcast %cst_1 : f32 to vector<22x64xf32>
    %9 = vector.extract_strided_slice %6 {offsets = [0, 0], sizes = [16, 64], strides = [1, 1]} : vector<32x64xf32> to vector<16x64xf32>
    %10 = vector.extract_strided_slice %6 {offsets = [16, 0], sizes = [16, 64], strides = [1, 1]} : vector<32x64xf32> to vector<16x64xf32>
    %11 = tpu.concatenate %7, %9, %8, %7, %10, %8 in 0 : vector<2x64xf32>, vector<16x64xf32>, vector<22x64xf32>, vector<2x64xf32>, vector<16x64xf32>, vector<22x64xf32> -> vector<80x64xf32>
    %12 = vector.extract_strided_slice %11 {offsets = [0, 0], sizes = [32, 64], strides = [1, 1]} : vector<80x64xf32> to vector<32x64xf32>
    %13 = vector.extract_strided_slice %11 {offsets = [40, 0], sizes = [32, 64], strides = [1, 1]} : vector<80x64xf32> to vector<32x64xf32>
    %14 = tpu.concatenate %12, %13 in 0 : vector<32x64xf32>, vector<32x64xf32> -> vector<64x64xf32>
    %c0_2 = arith.constant 0 : index
    %c0_3 = arith.constant 0 : index
    %15 = vector.load %arg1[%c0_2, %c0_3] : memref<360x128xf32, #tpu.memory_space<vmem>>, vector<64x128xf32>
    %cst_4 = arith.constant dense<0.000000e+00> : vector<64x128xf32>
    %16 = tpu.matmul %14, %15, %cst_4 {dimension_numbers = #tpu.dot_dimension_numbers<[1], [0], [0], [1], [0, 0, 1, 1], [], []>} : vector<64x64xf32>, vector<64x128xf32>, vector<64x128xf32> -> vector<64x128xf32>
    %17 = vector.extract_strided_slice %11 {offsets = [1, 0], sizes = [32, 64], strides = [1, 1]} : vector<80x64xf32> to vector<32x64xf32>
    %18 = vector.extract_strided_slice %11 {offsets = [41, 0], sizes = [32, 64], strides = [1, 1]} : vector<80x64xf32> to vector<32x64xf32>
    %19 = tpu.concatenate %17, %18 in 0 : vector<32x64xf32>, vector<32x64xf32> -> vector<64x64xf32>
    %c64 = arith.constant 64 : index
    %c0_5 = arith.constant 0 : index
    %20 = vector.load %arg1[%c64, %c0_5] : memref<360x128xf32, #tpu.memory_space<vmem>>, vector<64x128xf32>
    %cst_6 = arith.constant dense<0.000000e+00> : vector<64x128xf32>
    %21 = tpu.matmul %19, %20, %cst_6 {dimension_numbers = #tpu.dot_dimension_numbers<[1], [0], [0], [1], [0, 0, 1, 1], [], []>} : vector<64x64xf32>, vector<64x128xf32>, vector<64x128xf32> -> vector<64x128xf32>
    %22 = arith.addf %16, %21 : vector<64x128xf32>
    %23 = vector.extract_strided_slice %11 {offsets = [2, 0], sizes = [32, 64], strides = [1, 1]} : vector<80x64xf32> to vector<32x64xf32>
    %24 = vector.extract_strided_slice %11 {offsets = [42, 0], sizes = [32, 64], strides = [1, 1]} : vector<80x64xf32> to vector<32x64xf32>
    %25 = tpu.concatenate %23, %24 in 0 : vector<32x64xf32>, vector<32x64xf32> -> vector<64x64xf32>
    %c128 = arith.constant 128 : index
    %c0_7 = arith.constant 0 : index
    %26 = vector.load %arg1[%c128, %c0_7] : memref<360x128xf32, #tpu.memory_space<vmem>>, vector<64x128xf32>
    %cst_8 = arith.constant dense<0.000000e+00> : vector<64x128xf32>
    %27 = tpu.matmul %25, %26, %cst_8 {dimension_numbers = #tpu.dot_dimension_numbers<[1], [0], [0], [1], [0, 0, 1, 1], [], []>} : vector<64x64xf32>, vector<64x128xf32>, vector<64x128xf32> -> vector<64x128xf32>
    %28 = arith.addf %22, %27 : vector<64x128xf32>
    %29 = vector.extract_strided_slice %11 {offsets = [3, 0], sizes = [32, 64], strides = [1, 1]} : vector<80x64xf32> to vector<32x64xf32>
    %30 = vector.extract_strided_slice %11 {offsets = [43, 0], sizes = [32, 64], strides = [1, 1]} : vector<80x64xf32> to vector<32x64xf32>
    %31 = tpu.concatenate %29, %30 in 0 : vector<32x64xf32>, vector<32x64xf32> -> vector<64x64xf32>
    %c192 = arith.constant 192 : index
    %c0_9 = arith.constant 0 : index
    %32 = vector.load %arg1[%c192, %c0_9] : memref<360x128xf32, #tpu.memory_space<vmem>>, vector<64x128xf32>
    %cst_10 = arith.constant dense<0.000000e+00> : vector<64x128xf32>
    %33 = tpu.matmul %31, %32, %cst_10 {dimension_numbers = #tpu.dot_dimension_numbers<[1], [0], [0], [1], [0, 0, 1, 1], [], []>} : vector<64x64xf32>, vector<64x128xf32>, vector<64x128xf32> -> vector<64x128xf32>
    %34 = arith.addf %28, %33 : vector<64x128xf32>
    %c256 = arith.constant 256 : index
    %c0_11 = arith.constant 0 : index
    %35 = vector.load %arg1[%c256, %c0_11] : memref<360x128xf32, #tpu.memory_space<vmem>>, vector<1x128xf32>
    %36 = vector.broadcast %35 : vector<1x128xf32> to vector<64x128xf32>
    %37 = arith.addf %34, %36 : vector<64x128xf32>
    %cst_12 = arith.constant 0.000000e+00 : f32
    %38 = vector.broadcast %cst_12 : f32 to vector<64x128xf32>
    %39 = arith.maximumf %37, %38 : vector<64x128xf32>
    %40 = tpu.iota {dimensions = array<i32: 0>} : vector<32x128xi32>
    %41 = tpu.iota {dimensions = array<i32: 1>} : vector<32x128xi32>
    %c32_i32 = arith.constant 32 : i32
    %42 = vector.broadcast %c32_i32 : i32 to vector<32x128xi32>
    %43 = arith.cmpi sge, %41, %42 : vector<32x128xi32>
    %c64_i32 = arith.constant 64 : i32
    %44 = vector.broadcast %c64_i32 : i32 to vector<32x128xi32>
    %45 = arith.cmpi slt, %41, %44 : vector<32x128xi32>
    %46 = arith.andi %43, %45 : vector<32x128xi1>
    %c16_i32 = arith.constant 16 : i32
    %c17_i32 = arith.constant 17 : i32
    %47 = vector.broadcast %c16_i32 : i32 to vector<32x128xi32>
    %48 = vector.broadcast %c17_i32 : i32 to vector<32x128xi32>
    %49 = arith.select %46, %47, %48 : vector<32x128xi1>, vector<32x128xi32>
    %50 = arith.cmpi slt, %40, %49 : vector<32x128xi32>
    %51 = vector.extract_strided_slice %39 {offsets = [0, 0], sizes = [32, 128], strides = [1, 1]} : vector<64x128xf32> to vector<32x128xf32>
    %cst_13 = arith.constant -1.000000e+30 : f32
    %52 = vector.broadcast %cst_13 : f32 to vector<32x128xf32>
    %53 = arith.select %50, %51, %52 : vector<32x128xi1>, vector<32x128xf32>
    %cst_14 = arith.constant dense<0xFF800000> : vector<128xf32>
    %54 = vector.multi_reduction <maximumf>, %53, %cst_14 [0] : vector<32x128xf32> to vector<128xf32>
    %55 = vector.shape_cast %54 : vector<128xf32> to vector<1x128xf32>
    %56 = vector.extract_strided_slice %39 {offsets = [32, 0], sizes = [32, 128], strides = [1, 1]} : vector<64x128xf32> to vector<32x128xf32>
    %cst_15 = arith.constant -1.000000e+30 : f32
    %57 = vector.broadcast %cst_15 : f32 to vector<32x128xf32>
    %58 = arith.select %50, %56, %57 : vector<32x128xi1>, vector<32x128xf32>
    %cst_16 = arith.constant dense<0xFF800000> : vector<128xf32>
    %59 = vector.multi_reduction <maximumf>, %58, %cst_16 [0] : vector<32x128xf32> to vector<128xf32>
    %60 = vector.shape_cast %59 : vector<128xf32> to vector<1x128xf32>
    %cst_17 = arith.constant 0.000000e+00 : f32
    %61 = vector.broadcast %cst_17 : f32 to vector<6x128xf32>
    %62 = tpu.concatenate %55, %60, %61 in 0 : vector<1x128xf32>, vector<1x128xf32>, vector<6x128xf32> -> vector<8x128xf32>
    %c264 = arith.constant 264 : index
    %c0_18 = arith.constant 0 : index
    %63 = vector.load %arg1[%c264, %c0_18] : memref<360x128xf32, #tpu.memory_space<vmem>>, vector<16x128xf32>
    %c280 = arith.constant 280 : index
    %c0_19 = arith.constant 0 : index
    %64 = vector.load %arg1[%c280, %c0_19] : memref<360x128xf32, #tpu.memory_space<vmem>>, vector<1x128xf32>
    %c288 = arith.constant 288 : index
    %c0_20 = arith.constant 0 : index
    %65 = vector.load %arg1[%c288, %c0_20] : memref<360x128xf32, #tpu.memory_space<vmem>>, vector<32x128xf32>
    %66 = tpu.iota {dimensions = array<i32: 1>} : vector<8x128xi32>
    %c64_i32_21 = arith.constant 64 : i32
    %67 = vector.broadcast %c64_i32_21 : i32 to vector<8x128xi32>
    %68 = arith.cmpi sge, %66, %67 : vector<8x128xi32>
    %c96_i32 = arith.constant 96 : i32
    %69 = vector.broadcast %c96_i32 : i32 to vector<8x128xi32>
    %70 = arith.cmpi slt, %66, %69 : vector<8x128xi32>
    %71 = arith.andi %68, %70 : vector<8x128xi1>
    %cst_22 = arith.constant 1.000000e+00 : f32
    %cst_23 = arith.constant 5.000000e-01 : f32
    %72 = vector.broadcast %cst_22 : f32 to vector<8x128xf32>
    %73 = vector.broadcast %cst_23 : f32 to vector<8x128xf32>
    %74 = arith.select %71, %72, %73 : vector<8x128xi1>, vector<8x128xf32>
    %cst_24 = arith.constant 0.000000e+00 : f32
    %75 = vector.broadcast %cst_24 : f32 to vector<8x32xf32>
    %cst_25 = arith.constant 0.000000e+00 : f32
    %76 = vector.broadcast %cst_25 : f32 to vector<8x32xf32>
    %77 = vector.extract_strided_slice %62 {offsets = [0, 0], sizes = [8, 16], strides = [1, 1]} : vector<8x128xf32> to vector<8x16xf32>
    %cst_26 = arith.constant dense<0.000000e+00> : vector<8x128xf32>
    %78 = tpu.matmul %77, %63, %cst_26 {dimension_numbers = #tpu.dot_dimension_numbers<[1], [0], [0], [1], [0, 0, 1, 1], [], []>} : vector<8x16xf32>, vector<16x128xf32>, vector<8x128xf32> -> vector<8x128xf32>
    %79 = vector.broadcast %64 : vector<1x128xf32> to vector<8x128xf32>
    %80 = arith.addf %78, %79 : vector<8x128xf32>
    %cst_27 = arith.constant dense<0.000000e+00> : vector<8x128xf32>
    %81 = tpu.matmul %75, %65, %cst_27 {dimension_numbers = #tpu.dot_dimension_numbers<[1], [0], [0], [1], [0, 0, 1, 1], [], []>} : vector<8x32xf32>, vector<32x128xf32>, vector<8x128xf32> -> vector<8x128xf32>
    %82 = arith.addf %80, %81 : vector<8x128xf32>
    %83 = arith.mulf %82, %74 : vector<8x128xf32>
    %84 = math.tanh %83 : vector<8x128xf32>
    %cst_28 = arith.constant 5.000000e-01 : f32
    %85 = vector.broadcast %cst_28 : f32 to vector<8x128xf32>
    %86 = arith.mulf %85, %84 : vector<8x128xf32>
    %cst_29 = arith.constant 5.000000e-01 : f32
    %87 = vector.broadcast %cst_29 : f32 to vector<8x128xf32>
    %88 = arith.addf %86, %87 : vector<8x128xf32>
    %89 = arith.select %71, %84, %88 : vector<8x128xi1>, vector<8x128xf32>
    %90 = vector.extract_strided_slice %89 {offsets = [0, 0], sizes = [8, 32], strides = [1, 1]} : vector<8x128xf32> to vector<8x32xf32>
    %91 = vector.extract_strided_slice %89 {offsets = [0, 32], sizes = [8, 32], strides = [1, 1]} : vector<8x128xf32> to vector<8x32xf32>
    %92 = vector.extract_strided_slice %89 {offsets = [0, 64], sizes = [8, 32], strides = [1, 1]} : vector<8x128xf32> to vector<8x32xf32>
    %93 = vector.extract_strided_slice %89 {offsets = [0, 96], sizes = [8, 32], strides = [1, 1]} : vector<8x128xf32> to vector<8x32xf32>
    %94 = arith.mulf %91, %76 : vector<8x32xf32>
    %95 = arith.mulf %90, %92 : vector<8x32xf32>
    %96 = arith.addf %94, %95 : vector<8x32xf32>
    %97 = math.tanh %96 : vector<8x32xf32>
    %98 = arith.mulf %93, %97 : vector<8x32xf32>
    %99 = vector.extract_strided_slice %62 {offsets = [0, 16], sizes = [8, 16], strides = [1, 1]} : vector<8x128xf32> to vector<8x16xf32>
    %cst_30 = arith.constant dense<0.000000e+00> : vector<8x128xf32>
    %100 = tpu.matmul %99, %63, %cst_30 {dimension_numbers = #tpu.dot_dimension_numbers<[1], [0], [0], [1], [0, 0, 1, 1], [], []>} : vector<8x16xf32>, vector<16x128xf32>, vector<8x128xf32> -> vector<8x128xf32>
    %101 = vector.broadcast %64 : vector<1x128xf32> to vector<8x128xf32>
    %102 = arith.addf %100, %101 : vector<8x128xf32>
    %cst_31 = arith.constant dense<0.000000e+00> : vector<8x128xf32>
    %103 = tpu.matmul %98, %65, %cst_31 {dimension_numbers = #tpu.dot_dimension_numbers<[1], [0], [0], [1], [0, 0, 1, 1], [], []>} : vector<8x32xf32>, vector<32x128xf32>, vector<8x128xf32> -> vector<8x128xf32>
    %104 = arith.addf %102, %103 : vector<8x128xf32>
    %105 = arith.mulf %104, %74 : vector<8x128xf32>
    %106 = math.tanh %105 : vector<8x128xf32>
    %cst_32 = arith.constant 5.000000e-01 : f32
    %107 = vector.broadcast %cst_32 : f32 to vector<8x128xf32>
    %108 = arith.mulf %107, %106 : vector<8x128xf32>
    %cst_33 = arith.constant 5.000000e-01 : f32
    %109 = vector.broadcast %cst_33 : f32 to vector<8x128xf32>
    %110 = arith.addf %108, %109 : vector<8x128xf32>
    %111 = arith.select %71, %106, %110 : vector<8x128xi1>, vector<8x128xf32>
    %112 = vector.extract_strided_slice %111 {offsets = [0, 0], sizes = [8, 32], strides = [1, 1]} : vector<8x128xf32> to vector<8x32xf32>
    %113 = vector.extract_strided_slice %111 {offsets = [0, 32], sizes = [8, 32], strides = [1, 1]} : vector<8x128xf32> to vector<8x32xf32>
    %114 = vector.extract_strided_slice %111 {offsets = [0, 64], sizes = [8, 32], strides = [1, 1]} : vector<8x128xf32> to vector<8x32xf32>
    %115 = vector.extract_strided_slice %111 {offsets = [0, 96], sizes = [8, 32], strides = [1, 1]} : vector<8x128xf32> to vector<8x32xf32>
    %116 = arith.mulf %113, %96 : vector<8x32xf32>
    %117 = arith.mulf %112, %114 : vector<8x32xf32>
    %118 = arith.addf %116, %117 : vector<8x32xf32>
    %119 = math.tanh %118 : vector<8x32xf32>
    %120 = arith.mulf %115, %119 : vector<8x32xf32>
    %121 = vector.extract_strided_slice %62 {offsets = [0, 32], sizes = [8, 16], strides = [1, 1]} : vector<8x128xf32> to vector<8x16xf32>
    %cst_34 = arith.constant dense<0.000000e+00> : vector<8x128xf32>
    %122 = tpu.matmul %121, %63, %cst_34 {dimension_numbers = #tpu.dot_dimension_numbers<[1], [0], [0], [1], [0, 0, 1, 1], [], []>} : vector<8x16xf32>, vector<16x128xf32>, vector<8x128xf32> -> vector<8x128xf32>
    %123 = vector.broadcast %64 : vector<1x128xf32> to vector<8x128xf32>
    %124 = arith.addf %122, %123 : vector<8x128xf32>
    %cst_35 = arith.constant dense<0.000000e+00> : vector<8x128xf32>
    %125 = tpu.matmul %120, %65, %cst_35 {dimension_numbers = #tpu.dot_dimension_numbers<[1], [0], [0], [1], [0, 0, 1, 1], [], []>} : vector<8x32xf32>, vector<32x128xf32>, vector<8x128xf32> -> vector<8x128xf32>
    %126 = arith.addf %124, %125 : vector<8x128xf32>
    %127 = arith.mulf %126, %74 : vector<8x128xf32>
    %128 = math.tanh %127 : vector<8x128xf32>
    %cst_36 = arith.constant 5.000000e-01 : f32
    %129 = vector.broadcast %cst_36 : f32 to vector<8x128xf32>
    %130 = arith.mulf %129, %128 : vector<8x128xf32>
    %cst_37 = arith.constant 5.000000e-01 : f32
    %131 = vector.broadcast %cst_37 : f32 to vector<8x128xf32>
    %132 = arith.addf %130, %131 : vector<8x128xf32>
    %133 = arith.select %71, %128, %132 : vector<8x128xi1>, vector<8x128xf32>
    %134 = vector.extract_strided_slice %133 {offsets = [0, 0], sizes = [8, 32], strides = [1, 1]} : vector<8x128xf32> to vector<8x32xf32>
    %135 = vector.extract_strided_slice %133 {offsets = [0, 32], sizes = [8, 32], strides = [1, 1]} : vector<8x128xf32> to vector<8x32xf32>
    %136 = vector.extract_strided_slice %133 {offsets = [0, 64], sizes = [8, 32], strides = [1, 1]} : vector<8x128xf32> to vector<8x32xf32>
    %137 = vector.extract_strided_slice %133 {offsets = [0, 96], sizes = [8, 32], strides = [1, 1]} : vector<8x128xf32> to vector<8x32xf32>
    %138 = arith.mulf %135, %118 : vector<8x32xf32>
    %139 = arith.mulf %134, %136 : vector<8x32xf32>
    %140 = arith.addf %138, %139 : vector<8x32xf32>
    %141 = math.tanh %140 : vector<8x32xf32>
    %142 = arith.mulf %137, %141 : vector<8x32xf32>
    %143 = vector.extract_strided_slice %62 {offsets = [0, 48], sizes = [8, 16], strides = [1, 1]} : vector<8x128xf32> to vector<8x16xf32>
    %cst_38 = arith.constant dense<0.000000e+00> : vector<8x128xf32>
    %144 = tpu.matmul %143, %63, %cst_38 {dimension_numbers = #tpu.dot_dimension_numbers<[1], [0], [0], [1], [0, 0, 1, 1], [], []>} : vector<8x16xf32>, vector<16x128xf32>, vector<8x128xf32> -> vector<8x128xf32>
    %145 = vector.broadcast %64 : vector<1x128xf32> to vector<8x128xf32>
    %146 = arith.addf %144, %145 : vector<8x128xf32>
    %cst_39 = arith.constant dense<0.000000e+00> : vector<8x128xf32>
    %147 = tpu.matmul %142, %65, %cst_39 {dimension_numbers = #tpu.dot_dimension_numbers<[1], [0], [0], [1], [0, 0, 1, 1], [], []>} : vector<8x32xf32>, vector<32x128xf32>, vector<8x128xf32> -> vector<8x128xf32>
    %148 = arith.addf %146, %147 : vector<8x128xf32>
    %149 = arith.mulf %148, %74 : vector<8x128xf32>
    %150 = math.tanh %149 : vector<8x128xf32>
    %cst_40 = arith.constant 5.000000e-01 : f32
    %151 = vector.broadcast %cst_40 : f32 to vector<8x128xf32>
    %152 = arith.mulf %151, %150 : vector<8x128xf32>
    %cst_41 = arith.constant 5.000000e-01 : f32
    %153 = vector.broadcast %cst_41 : f32 to vector<8x128xf32>
    %154 = arith.addf %152, %153 : vector<8x128xf32>
    %155 = arith.select %71, %150, %154 : vector<8x128xi1>, vector<8x128xf32>
    %156 = vector.extract_strided_slice %155 {offsets = [0, 0], sizes = [8, 32], strides = [1, 1]} : vector<8x128xf32> to vector<8x32xf32>
    %157 = vector.extract_strided_slice %155 {offsets = [0, 32], sizes = [8, 32], strides = [1, 1]} : vector<8x128xf32> to vector<8x32xf32>
    %158 = vector.extract_strided_slice %155 {offsets = [0, 64], sizes = [8, 32], strides = [1, 1]} : vector<8x128xf32> to vector<8x32xf32>
    %159 = vector.extract_strided_slice %155 {offsets = [0, 96], sizes = [8, 32], strides = [1, 1]} : vector<8x128xf32> to vector<8x32xf32>
    %160 = arith.mulf %157, %140 : vector<8x32xf32>
    %161 = arith.mulf %156, %158 : vector<8x32xf32>
    %162 = arith.addf %160, %161 : vector<8x32xf32>
    %163 = math.tanh %162 : vector<8x32xf32>
    %164 = arith.mulf %159, %163 : vector<8x32xf32>
    %165 = vector.extract_strided_slice %62 {offsets = [0, 64], sizes = [8, 16], strides = [1, 1]} : vector<8x128xf32> to vector<8x16xf32>
    %cst_42 = arith.constant dense<0.000000e+00> : vector<8x128xf32>
    %166 = tpu.matmul %165, %63, %cst_42 {dimension_numbers = #tpu.dot_dimension_numbers<[1], [0], [0], [1], [0, 0, 1, 1], [], []>} : vector<8x16xf32>, vector<16x128xf32>, vector<8x128xf32> -> vector<8x128xf32>
    %167 = vector.broadcast %64 : vector<1x128xf32> to vector<8x128xf32>
    %168 = arith.addf %166, %167 : vector<8x128xf32>
    %cst_43 = arith.constant dense<0.000000e+00> : vector<8x128xf32>
    %169 = tpu.matmul %164, %65, %cst_43 {dimension_numbers = #tpu.dot_dimension_numbers<[1], [0], [0], [1], [0, 0, 1, 1], [], []>} : vector<8x32xf32>, vector<32x128xf32>, vector<8x128xf32> -> vector<8x128xf32>
    %170 = arith.addf %168, %169 : vector<8x128xf32>
    %171 = arith.mulf %170, %74 : vector<8x128xf32>
    %172 = math.tanh %171 : vector<8x128xf32>
    %cst_44 = arith.constant 5.000000e-01 : f32
    %173 = vector.broadcast %cst_44 : f32 to vector<8x128xf32>
    %174 = arith.mulf %173, %172 : vector<8x128xf32>
    %cst_45 = arith.constant 5.000000e-01 : f32
    %175 = vector.broadcast %cst_45 : f32 to vector<8x128xf32>
    %176 = arith.addf %174, %175 : vector<8x128xf32>
    %177 = arith.select %71, %172, %176 : vector<8x128xi1>, vector<8x128xf32>
    %178 = vector.extract_strided_slice %177 {offsets = [0, 0], sizes = [8, 32], strides = [1, 1]} : vector<8x128xf32> to vector<8x32xf32>
    %179 = vector.extract_strided_slice %177 {offsets = [0, 32], sizes = [8, 32], strides = [1, 1]} : vector<8x128xf32> to vector<8x32xf32>
    %180 = vector.extract_strided_slice %177 {offsets = [0, 64], sizes = [8, 32], strides = [1, 1]} : vector<8x128xf32> to vector<8x32xf32>
    %181 = vector.extract_strided_slice %177 {offsets = [0, 96], sizes = [8, 32], strides = [1, 1]} : vector<8x128xf32> to vector<8x32xf32>
    %182 = arith.mulf %179, %162 : vector<8x32xf32>
    %183 = arith.mulf %178, %180 : vector<8x32xf32>
    %184 = arith.addf %182, %183 : vector<8x32xf32>
    %185 = math.tanh %184 : vector<8x32xf32>
    %186 = arith.mulf %181, %185 : vector<8x32xf32>
    %187 = vector.extract_strided_slice %62 {offsets = [0, 80], sizes = [8, 16], strides = [1, 1]} : vector<8x128xf32> to vector<8x16xf32>
    %cst_46 = arith.constant dense<0.000000e+00> : vector<8x128xf32>
    %188 = tpu.matmul %187, %63, %cst_46 {dimension_numbers = #tpu.dot_dimension_numbers<[1], [0], [0], [1], [0, 0, 1, 1], [], []>} : vector<8x16xf32>, vector<16x128xf32>, vector<8x128xf32> -> vector<8x128xf32>
    %189 = vector.broadcast %64 : vector<1x128xf32> to vector<8x128xf32>
    %190 = arith.addf %188, %189 : vector<8x128xf32>
    %cst_47 = arith.constant dense<0.000000e+00> : vector<8x128xf32>
    %191 = tpu.matmul %186, %65, %cst_47 {dimension_numbers = #tpu.dot_dimension_numbers<[1], [0], [0], [1], [0, 0, 1, 1], [], []>} : vector<8x32xf32>, vector<32x128xf32>, vector<8x128xf32> -> vector<8x128xf32>
    %192 = arith.addf %190, %191 : vector<8x128xf32>
    %193 = arith.mulf %192, %74 : vector<8x128xf32>
    %194 = math.tanh %193 : vector<8x128xf32>
    %cst_48 = arith.constant 5.000000e-01 : f32
    %195 = vector.broadcast %cst_48 : f32 to vector<8x128xf32>
    %196 = arith.mulf %195, %194 : vector<8x128xf32>
    %cst_49 = arith.constant 5.000000e-01 : f32
    %197 = vector.broadcast %cst_49 : f32 to vector<8x128xf32>
    %198 = arith.addf %196, %197 : vector<8x128xf32>
    %199 = arith.select %71, %194, %198 : vector<8x128xi1>, vector<8x128xf32>
    %200 = vector.extract_strided_slice %199 {offsets = [0, 0], sizes = [8, 32], strides = [1, 1]} : vector<8x128xf32> to vector<8x32xf32>
    %201 = vector.extract_strided_slice %199 {offsets = [0, 32], sizes = [8, 32], strides = [1, 1]} : vector<8x128xf32> to vector<8x32xf32>
    %202 = vector.extract_strided_slice %199 {offsets = [0, 64], sizes = [8, 32], strides = [1, 1]} : vector<8x128xf32> to vector<8x32xf32>
    %203 = vector.extract_strided_slice %199 {offsets = [0, 96], sizes = [8, 32], strides = [1, 1]} : vector<8x128xf32> to vector<8x32xf32>
    %204 = arith.mulf %201, %184 : vector<8x32xf32>
    %205 = arith.mulf %200, %202 : vector<8x32xf32>
    %206 = arith.addf %204, %205 : vector<8x32xf32>
    %207 = math.tanh %206 : vector<8x32xf32>
    %208 = arith.mulf %203, %207 : vector<8x32xf32>
    %c320 = arith.constant 320 : index
    %c0_50 = arith.constant 0 : index
    %209 = vector.load %arg1[%c320, %c0_50] : memref<360x128xf32, #tpu.memory_space<vmem>>, vector<32x128xf32>
    %c352 = arith.constant 352 : index
    %c0_51 = arith.constant 0 : index
    %210 = vector.load %arg1[%c352, %c0_51] : memref<360x128xf32, #tpu.memory_space<vmem>>, vector<1x128xf32>
    %cst_52 = arith.constant dense<0.000000e+00> : vector<8x128xf32>
    %211 = tpu.matmul %208, %209, %cst_52 {dimension_numbers = #tpu.dot_dimension_numbers<[1], [0], [0], [1], [0, 0, 1, 1], [], []>} : vector<8x32xf32>, vector<32x128xf32>, vector<8x128xf32> -> vector<8x128xf32>
    %212 = vector.broadcast %210 : vector<1x128xf32> to vector<8x128xf32>
    %213 = arith.addf %211, %212 : vector<8x128xf32>
    %c0_53 = arith.constant 0 : index
    %c0_54 = arith.constant 0 : index
    %214 = vector.load %arg2[%c0_53, %c0_54] : memref<8x128xf32, #tpu.memory_space<vmem>>, vector<8x128xf32>
    tpu.vector_store %arg2[%c0_53, %c0_54], %213 {strides = array<i32>} : memref<8x128xf32, #tpu.memory_space<vmem>>, vector<8x128xf32>,
    return
  }
}

</mosaic_0001>

<llo_original>
// kernel: net_forward.1
$region0: #{net_forward.1}
  #allocation0 [shape = 'u32[]', space=smem, size = 0x4, offset = 0x4, fixed_abs, tag = 'smem constant byte address 0x4 - core index']
  #allocation1 [shape = 'u32[72,128]{1,0:T(1,128)}', space=vmem, size = 0x9000, scoped, tag = 'internal scratch']
  %s0 = inlined_call_operand.vmem [shape: s32[32,1], index: 0, kind: input, shape index: {}]
  %s1 = inlined_call_operand.hbm [shape: f32[360,128], index: 1, kind: input, shape index: {}]
  %s2 = inlined_call_operand.vmem [shape: f32[8,128], index: 2, kind: output, shape index: {}]
  %s3 = sld [smem:[#allocation0]]
  $region22: #{net_forward.1} parent=0
    _
  %s5 = ssub.s32 1, %s3
  %s6 = scalar_select 0, %s5, %s3
  $region1: #{net_forward.1} parent=0
    #allocation2 [shape = 'u8[184320]{0}', space=vmem, size = 0x2d000, scoped, tag = 'input window, operand 1, single buffered']
    #allocation3 [shape = 's32[1]{0}', space=sflag, size = 0x4, scoped, tag = 'scoped memory for net_forward.1']
    %7 = vsyncpa [#allocation3], 0
    // Predicated region
    $region2: #{net_forward.1} parent=1 // pred_check
      _
    $region3: #{net_forward.1} parent=1 // pred_check_branch
      %9 = sbr.rel (0) target = $region5
    $region4: #{net_forward.1} parent=1 // pred_region
      _
    $region5: #{net_forward.1} parent=1 // pred_fallthru
      _
    // Predicated region
    $region6: #{net_forward.1} parent=1 // pred_check
      _
    $region7: #{net_forward.1} parent=1 // pred_check_branch
      %11 = sbr.rel (0) target = $region9
    $region8: #{net_forward.1} parent=1 // pred_region
      %13 = vsyncadd [#allocation3], 0
      %s14 = sshll.u32 %s1, 4
      %s15 = int_to_ptr.hbm [resolvable:$true] %s14
      %s16 = sshll.u32 [#allocation2], 4
      %s17 = int_to_ptr.vmem [resolvable:$true] %s16
      %22 = dma.hbm_to_vmem [thread:$0]  %s15, 5760, %s17, [#allocation3], 128, 128, 8
    $region9: #{net_forward.1} parent=1 // pred_fallthru
      _
    // Predicated region
    $region10: #{net_forward.1} parent=1 // pred_check
      _
    $region11: #{net_forward.1} parent=1 // pred_check_branch
      %24 = sbr.rel (0) target = $region13
    $region12: #{net_forward.1} parent=1 // pred_region
      %26 = dma.done [#allocation3], 5760
    $region13: #{net_forward.1} parent=1 // pred_fallthru
      _
    %v27 = vld [vmem:[%s0] sm:$0xff]
    %v28 = vld [vmem:[%s0 + $0x8] sm:$0xff]
    %v29 = vld [vmem:[%s0 + $0x10] sm:$0xff]
    %v30 = vld [vmem:[%s0 + $0x18] sm:$0xff]
    %v31 = vlaneseq
    %v32 = vand.u32 %v31, 127
    %33 = vset.pattern.permute.xlu0 0
    %34 = vperm.xlu0 %33, %v27
    %v35 = vpop.permute.xlu0 %34
    %36 = vset.pattern.permute.xlu0 0
    %37 = vperm.xlu0 %36, %v28
    %v38 = vpop.permute.xlu0 %37
    %39 = vset.pattern.permute.xlu0 0
    %40 = vperm.xlu0 %39, %v29
    %v41 = vpop.permute.xlu0 %40
    %42 = vset.pattern.permute.xlu0 0
    %43 = vperm.xlu0 %42, %v30
    %v44 = vpop.permute.xlu0 %43
    %vm45 = vcmp.eq.s32.totalorder %v35, %v32
    %vm46 = vcmp.eq.s32.totalorder %v38, %v32
    %vm47 = vcmp.eq.s32.totalorder %v41, %v32
    %vm48 = vcmp.eq.s32.totalorder %v44, %v32
    %v49 = vsel %vm45, 1, 0
    %v50 = vsel %vm46, 1, 0
    %v51 = vsel %vm47, 1, 0
    %v52 = vsel %vm48, 1, 0
    %v53 = vcvt.s32.f32 %v49
    %v54 = vcvt.s32.f32 %v50
    %v55 = vcvt.s32.f32 %v51
    %v56 = vcvt.s32.f32 %v52
    %vm59 = vcmask 1041408
    %v60 = vrot.slane %v53, 6
    %v61 = vrot.slane %v54, 6
    %v62 = vsel %vm59, %v60, %v61
    %v67 = vrot.slane %v55, 6
    %v68 = vrot.slane %v56, 6
    %v69 = vsel %vm59, %v67, %v68
    %v72 = vsel %vm59, 0.0, %v60
    %v73 = vsel %vm59, %v61, 0.0
    %v74 = vsel %vm59, 0.0, %v67
    %v75 = vsel %vm59, %v68, 0.0
    %v76 = vld [vmem:[#allocation2] sm:$0xff]
    %v77 = vld [vmem:[#allocation2 + $0x8] sm:$0xff]
    %v78 = vld [vmem:[#allocation2 + $0x10] sm:$0xff]
    %v79 = vld [vmem:[#allocation2 + $0x18] sm:$0xff]
    %v80 = vld [vmem:[#allocation2 + $0x20] sm:$0xff]
    %v81 = vld [vmem:[#allocation2 + $0x28] sm:$0xff]
    %v82 = vld [vmem:[#allocation2 + $0x30] sm:$0xff]
    %v83 = vld [vmem:[#allocation2 + $0x38] sm:$0xff]
    %vm87 = vcmask 1046528
    %v88 = vrot.slane %v72, 1
    %v89 = vrot.slane %v62, 1
    %v90 = vsel %vm87, %v88, %v89
    %v91 = vrot.slane %v73, 1
    %v92 = vsel %vm87, %v89, %v91
    %v93 = vrot.slane 0.0, 1
    %v94 = vsel %vm87, %v91, %v93
    %v95 = vsel %vm87, %v93, %v93
    %v98 = vrot.slane %v74, 1
    %v99 = vrot.slane %v69, 1
    %v100 = vsel %vm87, %v98, %v99
    %v101 = vrot.slane %v75, 1
    %v102 = vsel %vm87, %v99, %v101
    %v103 = vsel %vm87, %v101, %v93
    %v104 = vld [vmem:[#allocation2 + $0x40] sm:$0xff]
    %v105 = vld [vmem:[#allocation2 + $0x48] sm:$0xff]
    %v106 = vld [vmem:[#allocation2 + $0x50] sm:$0xff]
    %v107 = vld [vmem:[#allocation2 + $0x58] sm:$0xff]
    %v108 = vld [vmem:[#allocation2 + $0x60] sm:$0xff]
    %v109 = vld [vmem:[#allocation2 + $0x68] sm:$0xff]
    %v110 = vld [vmem:[#allocation2 + $0x70] sm:$0xff]
    %v111 = vld [vmem:[#allocation2 + $0x78] sm:$0xff]
    %vm112 = vcmask 523264
    %v113 = vsel %vm112, %v90, 0
    %v115 = vsel %vm112, %v92, 0
    %v117 = vsel %vm112, %v94, 0
    %v119 = vsel %vm112, %v95, 0
    %v121 = vsel %vm112, %v100, 0
    %v123 = vsel %vm112, %v102, 0
    %v125 = vsel %vm112, %v103, 0
    %127 = vmatpush.msra.mxu0 0.0
    %128 = vmatpush.msra.mxu0 0.0
    %129 = vmatpush.msra.mxu0 0.0
    %130 = vmatpush.msra.mxu0 0.0
    %131 = vmatpush.msra.mxu0 0.0
    %132 = vmatpush.msra.mxu0 0.0
    %133 = vmatpush.msra.mxu0 0.0
    %134 = vmatpush.msra.mxu0 0.0
    %135 = vmatpush.msra.mxu0 %v111
    %136 = vmatpush.msra.mxu0 %v110
    %137 = vmatpush.msra.mxu0 %v109
    %138 = vmatpush.msra.mxu0 %v108
    %139 = vmatpush.msra.mxu0 %v107
    %140 = vmatpush.msra.mxu0 %v106
    %141 = vmatpush.msra.mxu0 %v105
    %142 = vmatpush.msra.mxu0 %v104
    %143 = vmatmul.f32.gmra.mxu0 %v113
    %v144 = vpop.f32.mrf.mxu0
    %v145 = vadd.f32 0.0, %v144
    %146 = vmatmul.f32.gmra.mxu0 %v115
    %v147 = vpop.f32.mrf.mxu0
    %v148 = vadd.f32 0.0, %v147
    %149 = vmatmul.f32.gmra.mxu0 %v117
    %v150 = vpop.f32.mrf.mxu0
    %v151 = vadd.f32 0.0, %v150
    %152 = vmatmul.f32.gmra.mxu0 %v119
    %v153 = vpop.f32.mrf.mxu0
    %v154 = vadd.f32 0.0, %v153
    %155 = vmatmul.f32.gmra.mxu0 %v121
    %v156 = vpop.f32.mrf.mxu0
    %v157 = vadd.f32 0.0, %v156
    %158 = vmatmul.f32.gmra.mxu0 %v123
    %v159 = vpop.f32.mrf.mxu0
    %v160 = vadd.f32 0.0, %v159
    %161 = vmatmul.f32.gmra.mxu0 %v125
    %v162 = vpop.f32.mrf.mxu0
    %v163 = vadd.f32 0.0, %v162
    %164 = vmatmul.f32.gmra.mxu0 %v119
    %v165 = vpop.f32.mrf.mxu0
    %v166 = vadd.f32 0.0, %v165
    %167 = vdwg.mxu0
    %v168 = vsel %vm112, %v72, 0
    %v170 = vsel %vm112, %v62, 0
    %v172 = vsel %vm112, %v73, 0
    %v174 = vsel %vm112, 0.0, 0
    %v176 = vsel %vm112, %v74, 0
    %v178 = vsel %vm112, %v69, 0
    %v180 = vsel %vm112, %v75, 0
    %182 = vmatpush.msra.mxu0 0.0
    %183 = vmatpush.msra.mxu0 0.0
    %184 = vmatpush.msra.mxu0 0.0
    %185 = vmatpush.msra.mxu0 0.0
    %186 = vmatpush.msra.mxu0 0.0
    %187 = vmatpush.msra.mxu0 0.0
    %188 = vmatpush.msra.mxu0 0.0
    %189 = vmatpush.msra.mxu0 0.0
    %190 = vmatpush.msra.mxu0 %v83
    %191 = vmatpush.msra.mxu0 %v82
    %192 = vmatpush.msra.mxu0 %v81
    %193 = vmatpush.msra.mxu0 %v80
    %194 = vmatpush.msra.mxu0 %v79
    %195 = vmatpush.msra.mxu0 %v78
    %196 = vmatpush.msra.mxu0 %v77
    %197 = vmatpush.msra.mxu0 %v76
    %198 = vmatmul.f32.gmra.mxu0 %v168
    %v199 = vpop.f32.mrf.mxu0
    %v200 = vadd.f32 %v145, %v199
    %201 = vmatmul.f32.gmra.mxu0 %v170
    %v202 = vpop.f32.mrf.mxu0
    %v203 = vadd.f32 %v148, %v202
    %204 = vmatmul.f32.gmra.mxu0 %v172
    %v205 = vpop.f32.mrf.mxu0
    %v206 = vadd.f32 %v151, %v205
    %207 = vmatmul.f32.gmra.mxu0 %v174
    %v208 = vpop.f32.mrf.mxu0
    %v209 = vadd.f32 %v154, %v208
    %210 = vmatmul.f32.gmra.mxu0 %v176
    %v211 = vpop.f32.mrf.mxu0
    %v212 = vadd.f32 %v157, %v211
    %213 = vmatmul.f32.gmra.mxu0 %v178
    %v214 = vpop.f32.mrf.mxu0
    %v215 = vadd.f32 %v160, %v214
    %216 = vmatmul.f32.gmra.mxu0 %v180
    %v217 = vpop.f32.mrf.mxu0
    %v218 = vadd.f32 %v163, %v217
    %219 = vmatmul.f32.gmra.mxu0 %v174
    %v220 = vpop.f32.mrf.mxu0
    %v221 = vadd.f32 %v166, %v220
    %222 = vdwg.mxu0
    %vm223 = vcmask 1045504
    %v224 = vrot.slane %v72, 2
    %v225 = vrot.slane %v62, 2
    %v226 = vsel %vm223, %v224, %v225
    %v227 = vrot.slane %v73, 2
    %v228 = vsel %vm223, %v225, %v227
    %v229 = vrot.slane 0.0, 2
    %v230 = vsel %vm223, %v227, %v229
    %v231 = vsel %vm223, %v229, %v229
    %v232 = vrot.slane %v74, 2
    %v233 = vrot.slane %v69, 2
    %v234 = vsel %vm223, %v232, %v233
    %v235 = vrot.slane %v75, 2
    %v236 = vsel %vm223, %v233, %v235
    %v237 = vsel %vm223, %v235, %v229
    %v238 = vld [vmem:[#allocation2 + $0x80] sm:$0xff]
    %v239 = vld [vmem:[#allocation2 + $0x88] sm:$0xff]
    %v240 = vld [vmem:[#allocation2 + $0x90] sm:$0xff]
    %v241 = vld [vmem:[#allocation2 + $0x98] sm:$0xff]
    %v242 = vld [vmem:[#allocation2 + $0xa0] sm:$0xff]
    %v243 = vld [vmem:[#allocation2 + $0xa8] sm:$0xff]
    %v244 = vld [vmem:[#allocation2 + $0xb0] sm:$0xff]
    %v245 = vld [vmem:[#allocation2 + $0xb8] sm:$0xff]
    %v246 = vsel %vm112, %v226, 0
    %v248 = vsel %vm112, %v228, 0
    %v250 = vsel %vm112, %v230, 0
    %v252 = vsel %vm112, %v231, 0
    %v254 = vsel %vm112, %v234, 0
    %v256 = vsel %vm112, %v236, 0
    %v258 = vsel %vm112, %v237, 0
    %260 = vmatpush.msra.mxu0 0.0
    %261 = vmatpush.msra.mxu0 0.0
    %262 = vmatpush.msra.mxu0 0.0
    %263 = vmatpush.msra.mxu0 0.0
    %264 = vmatpush.msra.mxu0 0.0
    %265 = vmatpush.msra.mxu0 0.0
    %266 = vmatpush.msra.mxu0 0.0
    %267 = vmatpush.msra.mxu0 0.0
    %268 = vmatpush.msra.mxu0 %v245
    %269 = vmatpush.msra.mxu0 %v244
    %270 = vmatpush.msra.mxu0 %v243
    %271 = vmatpush.msra.mxu0 %v242
    %272 = vmatpush.msra.mxu0 %v241
    %273 = vmatpush.msra.mxu0 %v240
    %274 = vmatpush.msra.mxu0 %v239
    %275 = vmatpush.msra.mxu0 %v238
    %276 = vmatmul.f32.gmra.mxu0 %v246
    %v277 = vpop.f32.mrf.mxu0
    %v278 = vadd.f32 0.0, %v277
    %279 = vmatmul.f32.gmra.mxu0 %v248
    %v280 = vpop.f32.mrf.mxu0
    %v281 = vadd.f32 0.0, %v280
    %282 = vmatmul.f32.gmra.mxu0 %v250
    %v283 = vpop.f32.mrf.mxu0
    %v284 = vadd.f32 0.0, %v283
    %285 = vmatmul.f32.gmra.mxu0 %v252
    %v286 = vpop.f32.mrf.mxu0
    %v287 = vadd.f32 0.0, %v286
    %288 = vmatmul.f32.gmra.mxu0 %v254
    %v289 = vpop.f32.mrf.mxu0
    %v290 = vadd.f32 0.0, %v289
    %291 = vmatmul.f32.gmra.mxu0 %v256
    %v292 = vpop.f32.mrf.mxu0
    %v293 = vadd.f32 0.0, %v292
    %294 = vmatmul.f32.gmra.mxu0 %v258
    %v295 = vpop.f32.mrf.mxu0
    %v296 = vadd.f32 0.0, %v295
    %297 = vmatmul.f32.gmra.mxu0 %v252
    %v298 = vpop.f32.mrf.mxu0
    %v299 = vadd.f32 0.0, %v298
    %300 = vdwg.mxu0
    %v301 = vadd.f32 %v200, %v278
    %v302 = vadd.f32 %v203, %v281
    %v303 = vadd.f32 %v206, %v284
    %v304 = vadd.f32 %v209, %v287
    %v305 = vadd.f32 %v212, %v290
    %v306 = vadd.f32 %v215, %v293
    %v307 = vadd.f32 %v218, %v296
    %v308 = vadd.f32 %v221, %v299
    %vm309 = vcmask 1044480
    %v310 = vrot.slane %v72, 3
    %v311 = vrot.slane %v62, 3
    %v312 = vsel %vm309, %v310, %v311
    %v313 = vrot.slane %v73, 3
    %v314 = vsel %vm309, %v311, %v313
    %v315 = vrot.slane 0.0, 3
    %v316 = vsel %vm309, %v313, %v315
    %v317 = vsel %vm309, %v315, %v315
    %v318 = vrot.slane %v74, 3
    %v319 = vrot.slane %v69, 3
    %v320 = vsel %vm309, %v318, %v319
    %v321 = vrot.slane %v75, 3
    %v322 = vsel %vm309, %v319, %v321
    %v323 = vsel %vm309, %v321, %v315
    %v324 = vld [vmem:[#allocation2 + $0xc0] sm:$0xff]
    %v325 = vld [vmem:[#allocation2 + $0xc8] sm:$0xff]
    %v326 = vld [vmem:[#allocation2 + $0xd0] sm:$0xff]
    %v327 = vld [vmem:[#allocation2 + $0xd8] sm:$0xff]
    %v328 = vld [vmem:[#allocation2 + $0xe0] sm:$0xff]
    %v329 = vld [vmem:[#allocation2 + $0xe8] sm:$0xff]
    %v330 = vld [vmem:[#allocation2 + $0xf0] sm:$0xff]
    %v331 = vld [vmem:[#allocation2 + $0xf8] sm:$0xff]
    %v332 = vsel %vm112, %v312, 0
    %v334 = vsel %vm112, %v314, 0
    %v336 = vsel %vm112, %v316, 0
    %v338 = vsel %vm112, %v317, 0
    %v340 = vsel %vm112, %v320, 0
    %v342 = vsel %vm112, %v322, 0
    %v344 = vsel %vm112, %v323, 0
    %346 = vmatpush.msra.mxu0 0.0
    %347 = vmatpush.msra.mxu0 0.0
    %348 = vmatpush.msra.mxu0 0.0
    %349 = vmatpush.msra.mxu0 0.0
    %350 = vmatpush.msra.mxu0 0.0
    %351 = vmatpush.msra.mxu0 0.0
    %352 = vmatpush.msra.mxu0 0.0
    %353 = vmatpush.msra.mxu0 0.0
    %354 = vmatpush.msra.mxu0 %v331
    %355 = vmatpush.msra.mxu0 %v330
    %356 = vmatpush.msra.mxu0 %v329
    %357 = vmatpush.msra.mxu0 %v328
    %358 = vmatpush.msra.mxu0 %v327
    %359 = vmatpush.msra.mxu0 %v326
    %360 = vmatpush.msra.mxu0 %v325
    %361 = vmatpush.msra.mxu0 %v324
    %362 = vmatmul.f32.gmra.mxu0 %v332
    %v363 = vpop.f32.mrf.mxu0
    %v364 = vadd.f32 0.0, %v363
    %365 = vmatmul.f32.gmra.mxu0 %v334
    %v366 = vpop.f32.mrf.mxu0
    %v367 = vadd.f32 0.0, %v366
    %368 = vmatmul.f32.gmra.mxu0 %v336
    %v369 = vpop.f32.mrf.mxu0
    %v370 = vadd.f32 0.0, %v369
    %371 = vmatmul.f32.gmra.mxu0 %v338
    %v372 = vpop.f32.mrf.mxu0
    %v373 = vadd.f32 0.0, %v372
    %374 = vmatmul.f32.gmra.mxu0 %v340
    %v375 = vpop.f32.mrf.mxu0
    %v376 = vadd.f32 0.0, %v375
    %377 = vmatmul.f32.gmra.mxu0 %v342
    %v378 = vpop.f32.mrf.mxu0
    %v379 = vadd.f32 0.0, %v378
    %380 = vmatmul.f32.gmra.mxu0 %v344
    %v381 = vpop.f32.mrf.mxu0
    %v382 = vadd.f32 0.0, %v381
    %383 = vmatmul.f32.gmra.mxu0 %v338
    %v384 = vpop.f32.mrf.mxu0
    %v385 = vadd.f32 0.0, %v384
    %386 = vdwg.mxu0
    %v387 = vadd.f32 %v301, %v364
    %v388 = vadd.f32 %v302, %v367
    %v389 = vadd.f32 %v303, %v370
    %v390 = vadd.f32 %v304, %v373
    %v391 = vadd.f32 %v305, %v376
    %v392 = vadd.f32 %v306, %v379
    %v393 = vadd.f32 %v307, %v382
    %v394 = vadd.f32 %v308, %v385
    %v395 = vld [vmem:[#allocation2 + $0x100] sm:$0x1]
    %v396 = vperm.slane %v395, 0
    %v397 = vadd.f32 %v387, %v396
    %v398 = vadd.f32 %v388, %v396
    %v399 = vadd.f32 %v389, %v396
    %v400 = vadd.f32 %v390, %v396
    %v401 = vadd.f32 %v391, %v396
    %v402 = vadd.f32 %v392, %v396
    %v403 = vadd.f32 %v393, %v396
    %v404 = vadd.f32 %v394, %v396
    %v405 = vmax.f32 %v397, 0.0
    %v406 = vmax.f32 %v398, 0.0
    %v407 = vmax.f32 %v399, 0.0
    %v408 = vmax.f32 %v400, 0.0
    %v409 = vmax.f32 %v401, 0.0
    %v410 = vmax.f32 %v402, 0.0
    %v411 = vmax.f32 %v403, 0.0
    %v412 = vmax.f32 %v404, 0.0
    %v413 = vlaneseq
    %v414 = vshrl.u32 %v413, 7
    %v415 = vadd.s32 %v414, 8
    %v416 = vadd.s32 %v414, 16
    %v417 = vadd.s32 %v414, 24
    %vm418 = vcmp.ge.s32.totalorder %v32, 32
    %vm419 = vcmp.lt.s32.totalorder %v32, 64
    %vm420 = vmand %vm418, %vm419
    %v421 = vsel %vm420, 16, 17
    %vm422 = vcmp.lt.s32.totalorder %v414, %v421
    %vm423 = vcmp.lt.s32.totalorder %v415, %v421
    %vm424 = vcmp.lt.s32.totalorder %v416, %v421
    %vm425 = vcmp.lt.s32.totalorder %v417, %v421
    %v426 = vsel %vm422, %v405, -1e+30
    %v427 = vsel %vm423, %v406, -1e+30
    %v428 = vsel %vm424, %v407, -1e+30
    %v429 = vsel %vm425, %v408, -1e+30
    %v430 = vmax.f32 %v426, %v427
    %v431 = vmax.f32 %v428, %v429
    %v432 = vmax.f32 %v430, %v431
    %v433 = vrot.slane %v432, 4
    %v434 = vmax.f32 %v432, %v433
    %v435 = vrot.slane %v434, 2
    %v436 = vmax.f32 %v434, %v435
    %v437 = vrot.slane %v436, 1
    %v438 = vmax.f32 %v436, %v437
    %v439 = vsel %vm422, %v409, -1e+30
    %v440 = vsel %vm423, %v410, -1e+30
    %v441 = vsel %vm424, %v411, -1e+30
    %v442 = vsel %vm425, %v412, -1e+30
    %v443 = vmax.f32 %v439, %v440
    %v444 = vmax.f32 %v441, %v442
    %v445 = vmax.f32 %v443, %v444
    %v446 = vrot.slane %v445, 4
    %v447 = vmax.f32 %v445, %v446
    %v448 = vrot.slane %v447, 2
    %v449 = vmax.f32 %v447, %v448
    %v450 = vrot.slane %v449, 1
    %v451 = vmax.f32 %v449, %v450
    %vm452 = vcmask 1040384
    %v453 = vsel %vm452, %v438, %v451
    %v454 = vsel %vm59, %v453, 0.0
    %v455 = vld [vmem:[#allocation2 + $0x108] sm:$0xff]
    %v456 = vld [vmem:[#allocation2 + $0x110] sm:$0xff]
    %v457 = vld [vmem:[#allocation2 + $0x118] sm:$0x1]
    %v458 = vld [vmem:[#allocation2 + $0x120] sm:$0xff]
    %v459 = vld [vmem:[#allocation2 + $0x128] sm:$0xff]
    %v460 = vld [vmem:[#allocation2 + $0x130] sm:$0xff]
    %v461 = vld [vmem:[#allocation2 + $0x138] sm:$0xff]
    %vm462 = vcmp.ge.s32.totalorder %v32, 64
    %vm463 = vcmp.lt.s32.totalorder %v32, 96
    %vm464 = vmand %vm462, %vm463
    %v465 = vsel %vm464, 1.0, 0.5
    %v466 = vperm.slane %v457, 0
    %vm467 = vcmask 130048
    %v469 = vsel %vm467, %v454, 0
    %471 = vmatpush.msra.mxu0 0.0
    %472 = vmatpush.msra.mxu0 0.0
    %473 = vmatpush.msra.mxu0 0.0
    %474 = vmatpush.msra.mxu0 0.0
    %475 = vmatpush.msra.mxu0 0.0
    %476 = vmatpush.msra.mxu0 0.0
    %477 = vmatpush.msra.mxu0 0.0
    %478 = vmatpush.msra.mxu0 0.0
    %479 = vmatpush.msra.mxu0 0.0
    %480 = vmatpush.msra.mxu0 0.0
    %481 = vmatpush.msra.mxu0 0.0
    %482 = vmatpush.msra.mxu0 0.0
    %483 = vmatpush.msra.mxu0 0.0
    %484 = vmatpush.msra.mxu0 0.0
    %485 = vmatpush.msra.mxu0 %v456
    %486 = vmatpush.msra.mxu0 %v455
    %487 = vmatmul.f32.gmra.mxu0 %v469
    %v488 = vpop.f32.mrf.mxu0
    %v489 = vadd.f32 %v466, %v488
    %490 = vdwg.mxu0
    %vm491 = vcmask 261120
    %v492 = vsel %vm491, 0.0, 0
    %494 = vmatpush.msra.mxu0 0.0
    %495 = vmatpush.msra.mxu0 0.0
    %496 = vmatpush.msra.mxu0 0.0
    %497 = vmatpush.msra.mxu0 0.0
    %498 = vmatpush.msra.mxu0 0.0
    %499 = vmatpush.msra.mxu0 0.0
    %500 = vmatpush.msra.mxu0 0.0
    %501 = vmatpush.msra.mxu0 0.0
    %502 = vmatpush.msra.mxu0 0.0
    %503 = vmatpush.msra.mxu0 0.0
    %504 = vmatpush.msra.mxu0 0.0
    %505 = vmatpush.msra.mxu0 0.0
    %506 = vmatpush.msra.mxu0 %v461
    %507 = vmatpush.msra.mxu0 %v460
    %508 = vmatpush.msra.mxu0 %v459
    %509 = vmatpush.msra.mxu0 %v458
    %510 = vmatmul.f32.gmra.mxu0 %v492
    %v511 = vpop.f32.mrf.mxu0
    %v512 = vadd.f32 0.0, %v511
    %513 = vdwg.mxu0
    %v514 = vadd.f32 %v489, %v512
    %v515 = vmul.f32 %v514, %v465
    %v516 = vtanh.pop %v515
    %v517 = vmul.f32 %v516, 0.5
    %v518 = vadd.f32 %v517, 0.5
    %v519 = vsel %vm464, %v516, %v518
    %v520 = vmul.f32 %v519, 0.0
    %522 = vrot.lane.b32.xlu0 %v519, 64
    %v523 = vpop.permute.xlu0 %522
    %v525 = vmul.f32 %v519, %v523
    %527 = vrot.lane.b32.xlu0 %v525, 32
    %v528 = vpop.permute.xlu0 %527
    %v530 = vadd.f32 %v520, %v528
    %v531 = vtanh.pop %v530
    %533 = vrot.lane.b32.xlu0 %v531, 64
    %v534 = vpop.permute.xlu0 %533
    %v536 = vmul.f32 %v519, %v534
    %537 = vrot.lane.b32.xlu0 %v454, 112
    %v538 = vpop.permute.xlu0 %537
    %v539 = vsel %vm467, %v538, 0
    %541 = vmatpush.msra.mxu0 0.0
    %542 = vmatpush.msra.mxu0 0.0
    %543 = vmatpush.msra.mxu0 0.0
    %544 = vmatpush.msra.mxu0 0.0
    %545 = vmatpush.msra.mxu0 0.0
    %546 = vmatpush.msra.mxu0 0.0
    %547 = vmatpush.msra.mxu0 0.0
    %548 = vmatpush.msra.mxu0 0.0
    %549 = vmatpush.msra.mxu0 0.0
    %550 = vmatpush.msra.mxu0 0.0
    %551 = vmatpush.msra.mxu0 0.0
    %552 = vmatpush.msra.mxu0 0.0
    %553 = vmatpush.msra.mxu0 0.0
    %554 = vmatpush.msra.mxu0 0.0
    %555 = vmatpush.msra.mxu0 %v456
    %556 = vmatpush.msra.mxu0 %v455
    %557 = vmatmul.f32.gmra.mxu0 %v539
    %v558 = vpop.f32.mrf.mxu0
    %v559 = vadd.f32 %v466, %v558
    %560 = vdwg.mxu0
    %562 = vrot.lane.b32.xlu0 %v536, 32
    %v563 = vpop.permute.xlu0 %562
    %v564 = vsel %vm491, %v563, 0
    %566 = vmatpush.msra.mxu0 0.0
    %567 = vmatpush.msra.mxu0 0.0
    %568 = vmatpush.msra.mxu0 0.0
    %569 = vmatpush.msra.mxu0 0.0
    %570 = vmatpush.msra.mxu0 0.0
    %571 = vmatpush.msra.mxu0 0.0
    %572 = vmatpush.msra.mxu0 0.0
    %573 = vmatpush.msra.mxu0 0.0
    %574 = vmatpush.msra.mxu0 0.0
    %575 = vmatpush.msra.mxu0 0.0
    %576 = vmatpush.msra.mxu0 0.0
    %577 = vmatpush.msra.mxu0 0.0
    %578 = vmatpush.msra.mxu0 %v461
    %579 = vmatpush.msra.mxu0 %v460
    %580 = vmatpush.msra.mxu0 %v459
    %581 = vmatpush.msra.mxu0 %v458
    %582 = vmatmul.f32.gmra.mxu0 %v564
    %v583 = vpop.f32.mrf.mxu0
    %v584 = vadd.f32 0.0, %v583
    %585 = vdwg.mxu0
    %v586 = vadd.f32 %v559, %v584
    %v587 = vmul.f32 %v586, %v465
    %v588 = vtanh.pop %v587
    %v589 = vmul.f32 %v588, 0.5
    %v590 = vadd.f32 %v589, 0.5
    %v591 = vsel %vm464, %v588, %v590
    %v592 = vmul.f32 %v591, %v530
    %594 = vrot.lane.b32.xlu0 %v591, 64
    %v595 = vpop.permute.xlu0 %594
    %v597 = vmul.f32 %v591, %v595
    %599 = vrot.lane.b32.xlu0 %v597, 32
    %v600 = vpop.permute.xlu0 %599
    %v602 = vadd.f32 %v592, %v600
    %v603 = vtanh.pop %v602
    %605 = vrot.lane.b32.xlu0 %v603, 64
    %v606 = vpop.permute.xlu0 %605
    %v608 = vmul.f32 %v591, %v606
    %609 = vrot.lane.b32.xlu0 %v454, 96
    %v610 = vpop.permute.xlu0 %609
    %v611 = vsel %vm467, %v610, 0
    %613 = vmatpush.msra.mxu0 0.0
    %614 = vmatpush.msra.mxu0 0.0
    %615 = vmatpush.msra.mxu0 0.0
    %616 = vmatpush.msra.mxu0 0.0
    %617 = vmatpush.msra.mxu0 0.0
    %618 = vmatpush.msra.mxu0 0.0
    %619 = vmatpush.msra.mxu0 0.0
    %620 = vmatpush.msra.mxu0 0.0
    %621 = vmatpush.msra.mxu0 0.0
    %622 = vmatpush.msra.mxu0 0.0
    %623 = vmatpush.msra.mxu0 0.0
    %624 = vmatpush.msra.mxu0 0.0
    %625 = vmatpush.msra.mxu0 0.0
    %626 = vmatpush.msra.mxu0 0.0
    %627 = vmatpush.msra.mxu0 %v456
    %628 = vmatpush.msra.mxu0 %v455
    %629 = vmatmul.f32.gmra.mxu0 %v611
    %v630 = vpop.f32.mrf.mxu0
    %v631 = vadd.f32 %v466, %v630
    %632 = vdwg.mxu0
    %634 = vrot.lane.b32.xlu0 %v608, 32
    %v635 = vpop.permute.xlu0 %634
    %v636 = vsel %vm491, %v635, 0
    %638 = vmatpush.msra.mxu0 0.0
    %639 = vmatpush.msra.mxu0 0.0
    %640 = vmatpush.msra.mxu0 0.0
    %641 = vmatpush.msra.mxu0 0.0
    %642 = vmatpush.msra.mxu0 0.0
    %643 = vmatpush.msra.mxu0 0.0
    %644 = vmatpush.msra.mxu0 0.0
    %645 = vmatpush.msra.mxu0 0.0
    %646 = vmatpush.msra.mxu0 0.0
    %647 = vmatpush.msra.mxu0 0.0
    %648 = vmatpush.msra.mxu0 0.0
    %649 = vmatpush.msra.mxu0 0.0
    %650 = vmatpush.msra.mxu0 %v461
    %651 = vmatpush.msra.mxu0 %v460
    %652 = vmatpush.msra.mxu0 %v459
    %653 = vmatpush.msra.mxu0 %v458
    %654 = vmatmul.f32.gmra.mxu0 %v636
    %v655 = vpop.f32.mrf.mxu0
    %v656 = vadd.f32 0.0, %v655
    %657 = vdwg.mxu0
    %v658 = vadd.f32 %v631, %v656
    %v659 = vmul.f32 %v658, %v465
    %v660 = vtanh.pop %v659
    %v661 = vmul.f32 %v660, 0.5
    %v662 = vadd.f32 %v661, 0.5
    %v663 = vsel %vm464, %v660, %v662
    %v664 = vmul.f32 %v663, %v602
    %666 = vrot.lane.b32.xlu0 %v663, 64
    %v667 = vpop.permute.xlu0 %666
    %v669 = vmul.f32 %v663, %v667
    %671 = vrot.lane.b32.xlu0 %v669, 32
    %v672 = vpop.permute.xlu0 %671
    %v674 = vadd.f32 %v664, %v672
    %v675 = vtanh.pop %v674
    %677 = vrot.lane.b32.xlu0 %v675, 64
    %v678 = vpop.permute.xlu0 %677
    %v680 = vmul.f32 %v663, %v678
    %681 = vrot.lane.b32.xlu0 %v454, 80
    %v682 = vpop.permute.xlu0 %681
    %v683 = vsel %vm467, %v682, 0
    %685 = vmatpush.msra.mxu0 0.0
    %686 = vmatpush.msra.mxu0 0.0
    %687 = vmatpush.msra.mxu0 0.0
    %688 = vmatpush.msra.mxu0 0.0
    %689 = vmatpush.msra.mxu0 0.0
    %690 = vmatpush.msra.mxu0 0.0
    %691 = vmatpush.msra.mxu0 0.0
    %692 = vmatpush.msra.mxu0 0.0
    %693 = vmatpush.msra.mxu0 0.0
    %694 = vmatpush.msra.mxu0 0.0
    %695 = vmatpush.msra.mxu0 0.0
    %696 = vmatpush.msra.mxu0 0.0
    %697 = vmatpush.msra.mxu0 0.0
    %698 = vmatpush.msra.mxu0 0.0
    %699 = vmatpush.msra.mxu0 %v456
    %700 = vmatpush.msra.mxu0 %v455
    %701 = vmatmul.f32.gmra.mxu0 %v683
    %v702 = vpop.f32.mrf.mxu0
    %v703 = vadd.f32 %v466, %v702
    %704 = vdwg.mxu0
    %706 = vrot.lane.b32.xlu0 %v680, 32
    %v707 = vpop.permute.xlu0 %706
    %v708 = vsel %vm491, %v707, 0
    %710 = vmatpush.msra.mxu0 0.0
    %711 = vmatpush.msra.mxu0 0.0
    %712 = vmatpush.msra.mxu0 0.0
    %713 = vmatpush.msra.mxu0 0.0
    %714 = vmatpush.msra.mxu0 0.0
    %715 = vmatpush.msra.mxu0 0.0
    %716 = vmatpush.msra.mxu0 0.0
    %717 = vmatpush.msra.mxu0 0.0
    %718 = vmatpush.msra.mxu0 0.0
    %719 = vmatpush.msra.mxu0 0.0
    %720 = vmatpush.msra.mxu0 0.0
    %721 = vmatpush.msra.mxu0 0.0
    %722 = vmatpush.msra.mxu0 %v461
    %723 = vmatpush.msra.mxu0 %v460
    %724 = vmatpush.msra.mxu0 %v459
    %725 = vmatpush.msra.mxu0 %v458
    %726 = vmatmul.f32.gmra.mxu0 %v708
    %v727 = vpop.f32.mrf.mxu0
    %v728 = vadd.f32 0.0, %v727
    %729 = vdwg.mxu0
    %v730 = vadd.f32 %v703, %v728
    %v731 = vmul.f32 %v730, %v465
    %v732 = vtanh.pop %v731
    %v733 = vmul.f32 %v732, 0.5
    %v734 = vadd.f32 %v733, 0.5
    %v735 = vsel %vm464, %v732, %v734
    %v736 = vmul.f32 %v735, %v674
    %738 = vrot.lane.b32.xlu0 %v735, 64
    %v739 = vpop.permute.xlu0 %738
    %v741 = vmul.f32 %v735, %v739
    %743 = vrot.lane.b32.xlu0 %v741, 32
    %v744 = vpop.permute.xlu0 %743
    %v746 = vadd.f32 %v736, %v744
    %v747 = vtanh.pop %v746
    %749 = vrot.lane.b32.xlu0 %v747, 64
    %v750 = vpop.permute.xlu0 %749
    %v752 = vmul.f32 %v735, %v750
    %753 = vrot.lane.b32.xlu0 %v454, 64
    %v754 = vpop.permute.xlu0 %753
    %v755 = vsel %vm467, %v754, 0
    %757 = vmatpush.msra.mxu0 0.0
    %758 = vmatpush.msra.mxu0 0.0
    %759 = vmatpush.msra.mxu0 0.0
    %760 = vmatpush.msra.mxu0 0.0
    %761 = vmatpush.msra.mxu0 0.0
    %762 = vmatpush.msra.mxu0 0.0
    %763 = vmatpush.msra.mxu0 0.0
    %764 = vmatpush.msra.mxu0 0.0
    %765 = vmatpush.msra.mxu0 0.0
    %766 = vmatpush.msra.mxu0 0.0
    %767 = vmatpush.msra.mxu0 0.0
    %768 = vmatpush.msra.mxu0 0.0
    %769 = vmatpush.msra.mxu0 0.0
    %770 = vmatpush.msra.mxu0 0.0
    %771 = vmatpush.msra.mxu0 %v456
    %772 = vmatpush.msra.mxu0 %v455
    %773 = vmatmul.f32.gmra.mxu0 %v755
    %v774 = vpop.f32.mrf.mxu0
    %v775 = vadd.f32 %v466, %v774
    %776 = vdwg.mxu0
    %778 = vrot.lane.b32.xlu0 %v752, 32
    %v779 = vpop.permute.xlu0 %778
    %v780 = vsel %vm491, %v779, 0
    %782 = vmatpush.msra.mxu0 0.0
    %783 = vmatpush.msra.mxu0 0.0
    %784 = vmatpush.msra.mxu0 0.0
    %785 = vmatpush.msra.mxu0 0.0
    %786 = vmatpush.msra.mxu0 0.0
    %787 = vmatpush.msra.mxu0 0.0
    %788 = vmatpush.msra.mxu0 0.0
    %789 = vmatpush.msra.mxu0 0.0
    %790 = vmatpush.msra.mxu0 0.0
    %791 = vmatpush.msra.mxu0 0.0
    %792 = vmatpush.msra.mxu0 0.0
    %793 = vmatpush.msra.mxu0 0.0
    %794 = vmatpush.msra.mxu0 %v461
    %795 = vmatpush.msra.mxu0 %v460
    %796 = vmatpush.msra.mxu0 %v459
    %797 = vmatpush.msra.mxu0 %v458
    %798 = vmatmul.f32.gmra.mxu0 %v780
    %v799 = vpop.f32.mrf.mxu0
    %v800 = vadd.f32 0.0, %v799
    %801 = vdwg.mxu0
    %v802 = vadd.f32 %v775, %v800
    %v803 = vmul.f32 %v802, %v465
    %v804 = vtanh.pop %v803
    %v805 = vmul.f32 %v804, 0.5
    %v806 = vadd.f32 %v805, 0.5
    %v807 = vsel %vm464, %v804, %v806
    %v808 = vmul.f32 %v807, %v746
    %810 = vrot.lane.b32.xlu0 %v807, 64
    %v811 = vpop.permute.xlu0 %810
    %v813 = vmul.f32 %v807, %v811
    %815 = vrot.lane.b32.xlu0 %v813, 32
    %v816 = vpop.permute.xlu0 %815
    %v818 = vadd.f32 %v808, %v816
    %v819 = vtanh.pop %v818
    %821 = vrot.lane.b32.xlu0 %v819, 64
    %v822 = vpop.permute.xlu0 %821
    %v824 = vmul.f32 %v807, %v822
    %825 = vrot.lane.b32.xlu0 %v454, 48
    %v826 = vpop.permute.xlu0 %825
    %v827 = vsel %vm467, %v826, 0
    %829 = vmatpush.msra.mxu0 0.0
    %830 = vmatpush.msra.mxu0 0.0
    %831 = vmatpush.msra.mxu0 0.0
    %832 = vmatpush.msra.mxu0 0.0
    %833 = vmatpush.msra.mxu0 0.0
    %834 = vmatpush.msra.mxu0 0.0
    %835 = vmatpush.msra.mxu0 0.0
    %836 = vmatpush.msra.mxu0 0.0
    %837 = vmatpush.msra.mxu0 0.0
    %838 = vmatpush.msra.mxu0 0.0
    %839 = vmatpush.msra.mxu0 0.0
    %840 = vmatpush.msra.mxu0 0.0
    %841 = vmatpush.msra.mxu0 0.0
    %842 = vmatpush.msra.mxu0 0.0
    %843 = vmatpush.msra.mxu0 %v456
    %844 = vmatpush.msra.mxu0 %v455
    %845 = vmatmul.f32.gmra.mxu0 %v827
    %v846 = vpop.f32.mrf.mxu0
    %v847 = vadd.f32 %v466, %v846
    %848 = vdwg.mxu0
    %850 = vrot.lane.b32.xlu0 %v824, 32
    %v851 = vpop.permute.xlu0 %850
    %v852 = vsel %vm491, %v851, 0
    %854 = vmatpush.msra.mxu0 0.0
    %855 = vmatpush.msra.mxu0 0.0
    %856 = vmatpush.msra.mxu0 0.0
    %857 = vmatpush.msra.mxu0 0.0
    %858 = vmatpush.msra.mxu0 0.0
    %859 = vmatpush.msra.mxu0 0.0
    %860 = vmatpush.msra.mxu0 0.0
    %861 = vmatpush.msra.mxu0 0.0
    %862 = vmatpush.msra.mxu0 0.0
    %863 = vmatpush.msra.mxu0 0.0
    %864 = vmatpush.msra.mxu0 0.0
    %865 = vmatpush.msra.mxu0 0.0
    %866 = vmatpush.msra.mxu0 %v461
    %867 = vmatpush.msra.mxu0 %v460
    %868 = vmatpush.msra.mxu0 %v459
    %869 = vmatpush.msra.mxu0 %v458
    %870 = vmatmul.f32.gmra.mxu0 %v852
    %v871 = vpop.f32.mrf.mxu0
    %v872 = vadd.f32 0.0, %v871
    %873 = vdwg.mxu0
    %v874 = vadd.f32 %v847, %v872
    %v875 = vmul.f32 %v874, %v465
    %v876 = vtanh.pop %v875
    %v877 = vmul.f32 %v876, 0.5
    %v878 = vadd.f32 %v877, 0.5
    %v879 = vsel %vm464, %v876, %v878
    %v880 = vmul.f32 %v879, %v818
    %882 = vrot.lane.b32.xlu0 %v879, 64
    %v883 = vpop.permute.xlu0 %882
    %v885 = vmul.f32 %v879, %v883
    %887 = vrot.lane.b32.xlu0 %v885, 32
    %v888 = vpop.permute.xlu0 %887
    %v890 = vadd.f32 %v880, %v888
    %v891 = vtanh.pop %v890
    %893 = vrot.lane.b32.xlu0 %v891, 64
    %v894 = vpop.permute.xlu0 %893
    %v896 = vmul.f32 %v879, %v894
    %v897 = vld [vmem:[#allocation2 + $0x140] sm:$0xff]
    %v898 = vld [vmem:[#allocation2 + $0x148] sm:$0xff]
    %v899 = vld [vmem:[#allocation2 + $0x150] sm:$0xff]
    %v900 = vld [vmem:[#allocation2 + $0x158] sm:$0xff]
    %v901 = vld [vmem:[#allocation2 + $0x160] sm:$0x1]
    %v902 = vperm.slane %v901, 0
    %904 = vrot.lane.b32.xlu0 %v896, 32
    %v905 = vpop.permute.xlu0 %904
    %v906 = vsel %vm491, %v905, 0
    %908 = vmatpush.msra.mxu0 0.0
    %909 = vmatpush.msra.mxu0 0.0
    %910 = vmatpush.msra.mxu0 0.0
    %911 = vmatpush.msra.mxu0 0.0
    %912 = vmatpush.msra.mxu0 0.0
    %913 = vmatpush.msra.mxu0 0.0
    %914 = vmatpush.msra.mxu0 0.0
    %915 = vmatpush.msra.mxu0 0.0
    %916 = vmatpush.msra.mxu0 0.0
    %917 = vmatpush.msra.mxu0 0.0
    %918 = vmatpush.msra.mxu0 0.0
    %919 = vmatpush.msra.mxu0 0.0
    %920 = vmatpush.msra.mxu0 %v900
    %921 = vmatpush.msra.mxu0 %v899
    %922 = vmatpush.msra.mxu0 %v898
    %923 = vmatpush.msra.mxu0 %v897
    %924 = vmatmul.f32.gmra.mxu0 %v906
    %v925 = vpop.f32.mrf.mxu0
    %v926 = vadd.f32 %v902, %v925
    %927 = vdwg.mxu0
    %928 = vst [vmem:[%s2] sm:$0xff] %v926
    // Predicated region
    $region14: #{net_forward.1} parent=1 // pred_check
      _
    $region15: #{net_forward.1} parent=1 // pred_check_branch
      %930 = sbr.rel (0) target = $region17
    $region16: #{net_forward.1} parent=1 // pred_region
      _
    $region17: #{net_forward.1} parent=1 // pred_fallthru
      _
    // Predicated region
    $region18: #{net_forward.1} parent=1 // pred_check
      _
    $region19: #{net_forward.1} parent=1 // pred_check_branch
      %932 = sbr.rel (0) target = $region21
    $region20: #{net_forward.1} parent=1 // pred_region
      _
    $region21: #{net_forward.1} parent=1 // pred_fallthru
      _
    %933 = vsyncpa [#allocation3], 1

</llo_original>
